<compile_context>
chip_gen: v5e
topology: v5e:2x2
jax: 0.10.0
libtpu: 0.0.40
codegen_flags: <defaults>
</compile_context>

<pallas_src>
import functools

import jax
import jax.numpy as jnp
from jax.experimental import pallas as pl
from jax.experimental.pallas import tpu as pltpu


def _attention_kernel(x_ref, w_ref, b_ref, vq_ref, o_ref):
    """Processes B_TILE batch rows per grid step.

    x_ref : [B_TILE, sl, hd]   (VMEM)
    w_ref : [hd, dense]
    b_ref : [1, dense]
    vq_ref: [1, dense]
    o_ref : [B_TILE, hd]
    """
    bt, sl, hd = x_ref.shape
    dense = w_ref.shape[1]

    x3 = x_ref[...]                                   # [bt, sl, hd]
    w = w_ref[...]                                    # [hd, dense]
    bias = b_ref[...]                                 # [1, dense]
    vq = vq_ref[...]                                  # [1, dense]

    # One tall MXU matmul for the whole batch tile: key = tanh(x @ W + b).
    x2 = x3.reshape(bt * sl, hd)                      # [bt*sl, hd]
    key2 = jnp.tanh(
        jnp.dot(x2, w, preferred_element_type=jnp.float32) + bias
    )                                                 # [bt*sl, dense]
    key3 = key2.reshape(bt, sl, dense)                # [bt, sl, dense]

    # score = <key, vq> via VPU multiply + lane reduction (no N=1 matmul).
    score = jnp.sum(key3 * vq, axis=-1, keepdims=True)   # [bt, sl, 1]

    # Softmax over the sequence dimension (axis=1), per batch row.
    m = jnp.max(score, axis=1, keepdims=True)             # [bt, 1, 1]
    e = jnp.exp(score - m)                                 # [bt, sl, 1]
    denom = jnp.sum(e, axis=1, keepdims=True)              # [bt, 1, 1]
    weight = e * pl.reciprocal(denom, approx=False)        # [bt, sl, 1]

    # res = sum_s weight * x  ->  one sublane-dense [bt, hd] store.
    res = jnp.sum(weight * x3, axis=1)                     # [bt, hd]
    o_ref[...] = res.astype(o_ref.dtype)


def _round_up(v, m):
    return ((v + m - 1) // m) * m


@functools.partial(jax.jit, static_argnames=("b_tile",))
def attention_forward(x, w_uq, b_uq, vq, *, b_tile=512):
    """x: [bs, sl, hd];  w_uq: [hd, dense];  b_uq: [dense];  vq: [dense]."""
    bs, sl, hd = x.shape
    dense = w_uq.shape[1]

    # Choose a batch tile: large enough to amortize per-step overhead, but
    # never larger than (batch rounded up to a sublane multiple of 8).
    bt = min(b_tile, _round_up(bs, 8))
    grid_b = pl.cdiv(bs, bt)
    bs_pad = grid_b * bt

    x_p = x
    if bs_pad != bs:
        # Zero padding is safe: padded rows produce finite junk that we slice off.
        x_p = jnp.pad(x, ((0, bs_pad - bs), (0, 0), (0, 0)))

    b_uq2 = b_uq.reshape(1, dense)
    vq2 = vq.reshape(1, dense)

    cost = pl.CostEstimate(
        flops=2 * bs * sl * hd * dense + 3 * bs * sl * (dense + hd),
        transcendentals=bs * sl * (dense + 1),
        bytes_accessed=(bs * sl * hd + bs * hd + hd * dense + 2 * dense) * 4,
    )

    out = pl.pallas_call(
        _attention_kernel,
        out_shape=jax.ShapeDtypeStruct((bs_pad, hd), x.dtype),
        grid_spec=pltpu.PrefetchScalarGridSpec(
            num_scalar_prefetch=0,
            grid=(grid_b,),
            in_specs=[
                pl.BlockSpec((bt, sl, hd), lambda b: (b, 0, 0)),
                pl.BlockSpec((hd, dense), lambda b: (0, 0)),   # VMEM-resident
                pl.BlockSpec((1, dense), lambda b: (0, 0)),    # VMEM-resident
                pl.BlockSpec((1, dense), lambda b: (0, 0)),    # VMEM-resident
            ],
            out_specs=pl.BlockSpec((bt, hd), lambda b: (b, 0)),
        ),
        compiler_params=pltpu.CompilerParams(
            dimension_semantics=("parallel",),
        ),
        cost_estimate=cost,
    )(x_p, w_uq, b_uq2, vq2)

    return out[:bs]


def attention_reference(x, w_uq, b_uq, vq):
    """Pure-JAX reference mirroring the PyTorch forward (mask=None)."""
    key = jnp.tanh(jnp.einsum("bsh,hd->bsd", x, w_uq) + b_uq)        # [bs, sl, dense]
    score = jnp.einsum("d,bsd->bs", vq, key)                         # [bs, sl]
    weight = jax.nn.softmax(score, axis=-1)                          # [bs, sl]
    res = jnp.einsum("bs,bsh->bh", weight, x)                        # [bs, hd]
    return res


if __name__ == "__main__":
    # Small shapes consistent with the module: signal_length=seq=8,
    # hidden_dim=32, Dense_dim=16, batch=2.
    bs, sl, hd, dense = 2, 8, 32, 16

    key0 = jax.random.PRNGKey(0)
    kx, kw, kb, kv = jax.random.split(key0, 4)

    x = jax.random.normal(kx, (bs, sl, hd), dtype=jnp.float32)
    # Deterministic parameter init (synthetic; not a checkpoint load).
    w_uq = jax.random.normal(kw, (hd, dense), dtype=jnp.float32) * 0.1
    b_uq = jax.random.normal(kb, (dense,), dtype=jnp.float32) * 0.1
    vq = jax.random.normal(kv, (dense,), dtype=jnp.float32)

    out = attention_forward(x, w_uq, b_uq, vq)
    out = jax.block_until_ready(out)

    ref = attention_reference(x, w_uq, b_uq, vq)
    assert out.shape == (bs, hd), out.shape
    assert jnp.allclose(out, ref, atol=1e-5, rtol=1e-5), "mismatch vs reference"

    # TODO(synk): the optional `mask` argument of the PyTorch forward is not
    # implemented (mask=None path only), matching the original kernel's scope.
    print("KERNEL_OK")
</pallas_src>

<mosaic_0001>
module attributes {stable_mosaic.version = 11 : i64} {
  func.func @_attention_kernel(%arg0: i32, %arg1: memref<8x8x32xf32, #tpu.memory_space<vmem>>, %arg2: memref<32x16xf32, #tpu.memory_space<vmem>>, %arg3: memref<1x16xf32, #tpu.memory_space<vmem>>, %arg4: memref<1x16xf32, #tpu.memory_space<vmem>>, %arg5: memref<8x32xf32, #tpu.memory_space<vmem>>) attributes {dimension_semantics = [#tpu.dimension_semantics<parallel>], iteration_bounds = array<i64: 1>, scalar_prefetch = 0 : i64, scratch_operands = 0 : i64, tpu.core_type = #tpu.core_type<tc>, window_params = [{transform_indices = @transform_0, window_bounds = array<i64: 8, 8, 32>}, {pipeline_mode = #tpu.pipeline_mode<synchronous>, transform_indices = @transform_1, window_bounds = array<i64: 32, 16>}, {pipeline_mode = #tpu.pipeline_mode<synchronous>, transform_indices = @transform_2, window_bounds = array<i64: 1, 16>}, {pipeline_mode = #tpu.pipeline_mode<synchronous>, transform_indices = @transform_3, window_bounds = array<i64: 1, 16>}, {transform_indices = @transform_4, window_bounds = array<i64: 8, 32>}]} {
    %c0 = arith.constant 0 : index
    %c0_0 = arith.constant 0 : index
    %c0_1 = arith.constant 0 : index
    %0 = vector.load %arg1[%c0, %c0_0, %c0_1] : memref<8x8x32xf32, #tpu.memory_space<vmem>>, vector<8x8x32xf32>
    %c0_2 = arith.constant 0 : index
    %c0_3 = arith.constant 0 : index
    %1 = vector.load %arg2[%c0_2, %c0_3] : memref<32x16xf32, #tpu.memory_space<vmem>>, vector<32x16xf32>
    %c0_4 = arith.constant 0 : index
    %c0_5 = arith.constant 0 : index
    %2 = vector.load %arg3[%c0_4, %c0_5] : memref<1x16xf32, #tpu.memory_space<vmem>>, vector<1x16xf32>
    %c0_6 = arith.constant 0 : index
    %c0_7 = arith.constant 0 : index
    %3 = vector.load %arg4[%c0_6, %c0_7] : memref<1x16xf32, #tpu.memory_space<vmem>>, vector<1x16xf32>
    %4 = vector.shape_cast %0 : vector<8x8x32xf32> to vector<64x32xf32>
    %cst = arith.constant dense<0.000000e+00> : vector<64x16xf32>
    %5 = tpu.matmul %4, %1, %cst {dimension_numbers = #tpu.dot_dimension_numbers<[1], [0], [0], [1], [0, 0, 1, 1], [], []>} : vector<64x32xf32>, vector<32x16xf32>, vector<64x16xf32> -> vector<64x16xf32>
    %6 = vector.broadcast %2 : vector<1x16xf32> to vector<64x16xf32>
    %7 = arith.addf %5, %6 : vector<64x16xf32>
    %8 = math.tanh %7 : vector<64x16xf32>
    %9 = vector.shape_cast %8 : vector<64x16xf32> to vector<8x8x16xf32>
    %10 = vector.shape_cast %3 : vector<1x16xf32> to vector<1x1x16xf32>
    %11 = vector.broadcast %10 : vector<1x1x16xf32> to vector<8x8x16xf32>
    %12 = arith.mulf %9, %11 : vector<8x8x16xf32>
    %cst_8 = arith.constant dense<0.000000e+00> : vector<8x8xf32>
    %13 = vector.multi_reduction <add>, %12, %cst_8 [2] : vector<8x8x16xf32> to vector<8x8xf32>
    %14 = vector.shape_cast %13 : vector<8x8xf32> to vector<8x8x1xf32>
    %cst_9 = arith.constant dense<0xFF800000> : vector<8x1xf32>
    %15 = vector.multi_reduction <maximumf>, %14, %cst_9 [1] : vector<8x8x1xf32> to vector<8x1xf32>
    %16 = vector.shape_cast %15 : vector<8x1xf32> to vector<8x1x1xf32>
    %17 = vector.broadcast %16 : vector<8x1x1xf32> to vector<8x8x1xf32>
    %18 = arith.subf %14, %17 : vector<8x8x1xf32>
    %19 = math.exp %18 : vector<8x8x1xf32>
    %cst_10 = arith.constant dense<0.000000e+00> : vector<8x1xf32>
    %20 = vector.multi_reduction <add>, %19, %cst_10 [1] : vector<8x8x1xf32> to vector<8x1xf32>
    %21 = vector.shape_cast %20 : vector<8x1xf32> to vector<8x1x1xf32>
    %22 = tpu.reciprocal %21 : vector<8x1x1xf32> -> vector<8x1x1xf32>
    %23 = vector.broadcast %22 : vector<8x1x1xf32> to vector<8x8x1xf32>
    %24 = arith.mulf %19, %23 : vector<8x8x1xf32>
    %25 = vector.broadcast %24 : vector<8x8x1xf32> to vector<8x8x32xf32>
    %26 = arith.mulf %25, %0 : vector<8x8x32xf32>
    %cst_11 = arith.constant dense<0.000000e+00> : vector<8x32xf32>
    %27 = vector.multi_reduction <add>, %26, %cst_11 [1] : vector<8x8x32xf32> to vector<8x32xf32>
    %c0_12 = arith.constant 0 : index
    %c0_13 = arith.constant 0 : index
    %28 = vector.load %arg5[%c0_12, %c0_13] : memref<8x32xf32, #tpu.memory_space<vmem>>, vector<8x32xf32>
    tpu.vector_store %arg5[%c0_12, %c0_13], %27 {strides = array<i32>} : memref<8x32xf32, #tpu.memory_space<vmem>>, vector<8x32xf32>,
    return
  }
  func.func @transform_0(%arg0: i32) -> (i32, i32, i32) {
    %c0_i32 = arith.constant 0 : i32
    %c0_i32_0 = arith.constant 0 : i32
    %c0_i32_1 = arith.constant 0 : i32
    return %arg0, %c0_i32, %c0_i32_0 : i32, i32, i32
  }
  func.func @transform_1(%arg0: i32) -> (i32, i32) {
    %c0_i32 = arith.constant 0 : i32
    %c0_i32_0 = arith.constant 0 : i32
    %c0_i32_1 = arith.constant 0 : i32
    return %c0_i32, %c0_i32_0 : i32, i32
  }
  func.func @transform_2(%arg0: i32) -> (i32, i32) {
    %c0_i32 = arith.constant 0 : i32
    %c0_i32_0 = arith.constant 0 : i32
    %c0_i32_1 = arith.constant 0 : i32
    return %c0_i32, %c0_i32_0 : i32, i32
  }
  func.func @transform_3(%arg0: i32) -> (i32, i32) {
    %c0_i32 = arith.constant 0 : i32
    %c0_i32_0 = arith.constant 0 : i32
    %c0_i32_1 = arith.constant 0 : i32
    return %c0_i32, %c0_i32_0 : i32, i32
  }
  func.func @transform_4(%arg0: i32) -> (i32, i32) {
    %c0_i32 = arith.constant 0 : i32
    %c0_i32_0 = arith.constant 0 : i32
    return %arg0, %c0_i32 : i32, i32
  }
}

</mosaic_0001>

<llo_original>
// kernel: attention_forward.1
$region0: #{attention_forward.1}
  #allocation0 [shape = 'u32[]', space=smem, size = 0x4, offset = 0x4, fixed_abs, tag = 'smem constant byte address 0x4 - core index']
  #allocation1 [shape = 'u32[72,128]{1,0:T(1,128)}', space=vmem, size = 0x9000, scoped, tag = 'internal scratch']
  %s0 = inlined_call_operand.vmem [shape: f32[8,8,32], index: 0, kind: input, shape index: {}]
  %s1 = inlined_call_operand.vmem [shape: f32[32,16], index: 1, kind: input, shape index: {}]
  %s2 = inlined_call_operand.vmem [shape: f32[1,16], index: 2, kind: input, shape index: {}]
  %s3 = inlined_call_operand.vmem [shape: f32[1,16], index: 3, kind: input, shape index: {}]
  %s4 = inlined_call_operand.vmem [shape: f32[8,32], index: 4, kind: output, shape index: {}]
  %s5 = sld [smem:[#allocation0]]
  $region26: #{attention_forward.1} parent=0
    _
  %s7 = ssub.s32 1, %s5
  %s8 = scalar_select 0, %s7, %s5
  // Predicated region
  $region2: #{attention_forward.1} parent=0 // pred_check
    _
  $region3: #{attention_forward.1} parent=0 // pred_check_branch
    %10 = sbr.rel (0) target = $region5
  $region4: #{attention_forward.1} parent=0 // pred_region
    _
  $region5: #{attention_forward.1} parent=0 // pred_fallthru
    _
  // Predicated region
  $region6: #{attention_forward.1} parent=0 // pred_check
    _
  $region7: #{attention_forward.1} parent=0 // pred_check_branch
    %12 = sbr.rel (0) target = $region9
  $region8: #{attention_forward.1} parent=0 // pred_region
    _
  $region9: #{attention_forward.1} parent=0 // pred_fallthru
    _
  // Predicated region
  $region10: #{attention_forward.1} parent=0 // pred_check
    _
  $region11: #{attention_forward.1} parent=0 // pred_check_branch
    %14 = sbr.rel (0) target = $region13
  $region12: #{attention_forward.1} parent=0 // pred_region
    _
  $region13: #{attention_forward.1} parent=0 // pred_fallthru
    _
  // Predicated region
  $region14: #{attention_forward.1} parent=0 // pred_check
    _
  $region15: #{attention_forward.1} parent=0 // pred_check_branch
    %16 = sbr.rel (0) target = $region17
  $region16: #{attention_forward.1} parent=0 // pred_region
    _
  $region17: #{attention_forward.1} parent=0 // pred_fallthru
    _
  %v17 = vld [vmem:[%s0] sm:$0xff]
  %v18 = vld [vmem:[%s0 + $0x8] sm:$0xff]
  %v19 = vld [vmem:[%s0 + $0x10] sm:$0xff]
  %v20 = vld [vmem:[%s0 + $0x18] sm:$0xff]
  %v21 = vld [vmem:[%s0 + $0x20] sm:$0xff]
  %v22 = vld [vmem:[%s0 + $0x28] sm:$0xff]
  %v23 = vld [vmem:[%s0 + $0x30] sm:$0xff]
  %v24 = vld [vmem:[%s0 + $0x38] sm:$0xff]
  %v25 = vld [vmem:[%s1] sm:$0xff]
  %v26 = vld [vmem:[%s1 + $0x8] sm:$0xff]
  %v27 = vld [vmem:[%s1 + $0x10] sm:$0xff]
  %v28 = vld [vmem:[%s1 + $0x18] sm:$0xff]
  %v29 = vld [vmem:[%s2] sm:$0x1]
  %v30 = vld [vmem:[%s3] sm:$0x1]
  %v32 = vperm.slane %v29, 0
  %vm34 = vcmask 261120
  %v36 = vsel %vm34, %v17, 0
  %v39 = vsel %vm34, %v18, 0
  %v42 = vsel %vm34, %v19, 0
  %v45 = vsel %vm34, %v20, 0
  %v48 = vsel %vm34, %v21, 0
  %v51 = vsel %vm34, %v22, 0
  %v54 = vsel %vm34, %v23, 0
  %v57 = vsel %vm34, %v24, 0
  %59 = vmatpush.msra.mxu0 0.0
  %60 = vmatpush.msra.mxu0 0.0
  %61 = vmatpush.msra.mxu0 0.0
  %62 = vmatpush.msra.mxu0 0.0
  %63 = vmatpush.msra.mxu0 0.0
  %64 = vmatpush.msra.mxu0 0.0
  %65 = vmatpush.msra.mxu0 0.0
  %66 = vmatpush.msra.mxu0 0.0
  %67 = vmatpush.msra.mxu0 0.0
  %68 = vmatpush.msra.mxu0 0.0
  %69 = vmatpush.msra.mxu0 0.0
  %70 = vmatpush.msra.mxu0 0.0
  %71 = vmatpush.msra.mxu0 %v28
  %72 = vmatpush.msra.mxu0 %v27
  %73 = vmatpush.msra.mxu0 %v26
  %74 = vmatpush.msra.mxu0 %v25
  %75 = vmatmul.f32.gmra.mxu0 %v36
  %v76 = vpop.f32.mrf.mxu0
  %v77 = vadd.f32 %v32, %v76
  %78 = vmatmul.f32.gmra.mxu0 %v39
  %v79 = vpop.f32.mrf.mxu0
  %v80 = vadd.f32 %v32, %v79
  %81 = vmatmul.f32.gmra.mxu0 %v42
  %v82 = vpop.f32.mrf.mxu0
  %v83 = vadd.f32 %v32, %v82
  %84 = vmatmul.f32.gmra.mxu0 %v45
  %v85 = vpop.f32.mrf.mxu0
  %v86 = vadd.f32 %v32, %v85
  %87 = vmatmul.f32.gmra.mxu0 %v48
  %v88 = vpop.f32.mrf.mxu0
  %v89 = vadd.f32 %v32, %v88
  %90 = vmatmul.f32.gmra.mxu0 %v51
  %v91 = vpop.f32.mrf.mxu0
  %v92 = vadd.f32 %v32, %v91
  %93 = vmatmul.f32.gmra.mxu0 %v54
  %v94 = vpop.f32.mrf.mxu0
  %v95 = vadd.f32 %v32, %v94
  %96 = vmatmul.f32.gmra.mxu0 %v57
  %v97 = vpop.f32.mrf.mxu0
  %v98 = vadd.f32 %v32, %v97
  %99 = vdwg.mxu0
  %v100 = vtanh.pop %v77
  %v101 = vtanh.pop %v80
  %v102 = vtanh.pop %v83
  %v103 = vtanh.pop %v86
  %v104 = vtanh.pop %v89
  %v105 = vtanh.pop %v92
  %v106 = vtanh.pop %v95
  %v107 = vtanh.pop %v98
  %v109 = vperm.slane %v30, 0
  %v111 = vmul.f32 %v100, %v109
  %v112 = vmul.f32 %v101, %v109
  %v113 = vmul.f32 %v102, %v109
  %v114 = vmul.f32 %v103, %v109
  %v115 = vmul.f32 %v104, %v109
  %v116 = vmul.f32 %v105, %v109
  %v117 = vmul.f32 %v106, %v109
  %v118 = vmul.f32 %v107, %v109
  %vm119 = vcmask 130048
  %v120 = vsel %vm119, %v111, 0.0
  %121 = vadd.xlane.f32.xlu0 %v120
  %v122 = vpop.xlane.xlu0 %121
  %v123 = vsel %vm119, %v112, 0.0
  %124 = vadd.xlane.f32.xlu0 %v123
  %v125 = vpop.xlane.xlu0 %124
  %v126 = vsel %vm119, %v113, 0.0
  %127 = vadd.xlane.f32.xlu0 %v126
  %v128 = vpop.xlane.xlu0 %127
  %v129 = vsel %vm119, %v114, 0.0
  %130 = vadd.xlane.f32.xlu0 %v129
  %v131 = vpop.xlane.xlu0 %130
  %v132 = vsel %vm119, %v115, 0.0
  %133 = vadd.xlane.f32.xlu0 %v132
  %v134 = vpop.xlane.xlu0 %133
  %v135 = vsel %vm119, %v116, 0.0
  %136 = vadd.xlane.f32.xlu0 %v135
  %v137 = vpop.xlane.xlu0 %136
  %v138 = vsel %vm119, %v117, 0.0
  %139 = vadd.xlane.f32.xlu0 %v138
  %v140 = vpop.xlane.xlu0 %139
  %v141 = vsel %vm119, %v118, 0.0
  %142 = vadd.xlane.f32.xlu0 %v141
  %v143 = vpop.xlane.xlu0 %142
  %v144 = vrot.slane %v122, 4
  %v145 = vmax.f32 %v122, %v144
  %v146 = vrot.slane %v145, 2
  %v147 = vmax.f32 %v145, %v146
  %v148 = vrot.slane %v147, 1
  %v149 = vmax.f32 %v147, %v148
  %v150 = vrot.slane %v125, 4
  %v151 = vmax.f32 %v125, %v150
  %v152 = vrot.slane %v151, 2
  %v153 = vmax.f32 %v151, %v152
  %v154 = vrot.slane %v153, 1
  %v155 = vmax.f32 %v153, %v154
  %v156 = vrot.slane %v128, 4
  %v157 = vmax.f32 %v128, %v156
  %v158 = vrot.slane %v157, 2
  %v159 = vmax.f32 %v157, %v158
  %v160 = vrot.slane %v159, 1
  %v161 = vmax.f32 %v159, %v160
  %v162 = vrot.slane %v131, 4
  %v163 = vmax.f32 %v131, %v162
  %v164 = vrot.slane %v163, 2
  %v165 = vmax.f32 %v163, %v164
  %v166 = vrot.slane %v165, 1
  %v167 = vmax.f32 %v165, %v166
  %v168 = vrot.slane %v134, 4
  %v169 = vmax.f32 %v134, %v168
  %v170 = vrot.slane %v169, 2
  %v171 = vmax.f32 %v169, %v170
  %v172 = vrot.slane %v171, 1
  %v173 = vmax.f32 %v171, %v172
  %v174 = vrot.slane %v137, 4
  %v175 = vmax.f32 %v137, %v174
  %v176 = vrot.slane %v175, 2
  %v177 = vmax.f32 %v175, %v176
  %v178 = vrot.slane %v177, 1
  %v179 = vmax.f32 %v177, %v178
  %v180 = vrot.slane %v140, 4
  %v181 = vmax.f32 %v140, %v180
  %v182 = vrot.slane %v181, 2
  %v183 = vmax.f32 %v181, %v182
  %v184 = vrot.slane %v183, 1
  %v185 = vmax.f32 %v183, %v184
  %v186 = vrot.slane %v143, 4
  %v187 = vmax.f32 %v143, %v186
  %v188 = vrot.slane %v187, 2
  %v189 = vmax.f32 %v187, %v188
  %v190 = vrot.slane %v189, 1
  %v191 = vmax.f32 %v189, %v190
  %v192 = vsub.f32 %v122, %v149
  %v193 = vsub.f32 %v125, %v155
  %v194 = vsub.f32 %v128, %v161
  %v195 = vsub.f32 %v131, %v167
  %v196 = vsub.f32 %v134, %v173
  %v197 = vsub.f32 %v137, %v179
  %v198 = vsub.f32 %v140, %v185
  %v199 = vsub.f32 %v143, %v191
  %v200 = vmul.f32 %v192, 1.442695
  %v201 = vpow.pop %v200
  %v202 = vmul.f32 %v193, 1.442695
  %v203 = vpow.pop %v202
  %v204 = vmul.f32 %v194, 1.442695
  %v205 = vpow.pop %v204
  %v206 = vmul.f32 %v195, 1.442695
  %v207 = vpow.pop %v206
  %v208 = vmul.f32 %v196, 1.442695
  %v209 = vpow.pop %v208
  %v210 = vmul.f32 %v197, 1.442695
  %v211 = vpow.pop %v210
  %v212 = vmul.f32 %v198, 1.442695
  %v213 = vpow.pop %v212
  %v214 = vmul.f32 %v199, 1.442695
  %v215 = vpow.pop %v214
  %v216 = vrot.slane %v201, 4
  %v217 = vadd.f32 %v201, %v216
  %v218 = vrot.slane %v217, 2
  %v219 = vadd.f32 %v217, %v218
  %v220 = vrot.slane %v219, 1
  %v221 = vadd.f32 %v219, %v220
  %v222 = vrot.slane %v203, 4
  %v223 = vadd.f32 %v203, %v222
  %v224 = vrot.slane %v223, 2
  %v225 = vadd.f32 %v223, %v224
  %v226 = vrot.slane %v225, 1
  %v227 = vadd.f32 %v225, %v226
  %v228 = vrot.slane %v205, 4
  %v229 = vadd.f32 %v205, %v228
  %v230 = vrot.slane %v229, 2
  %v231 = vadd.f32 %v229, %v230
  %v232 = vrot.slane %v231, 1
  %v233 = vadd.f32 %v231, %v232
  %v234 = vrot.slane %v207, 4
  %v235 = vadd.f32 %v207, %v234
  %v236 = vrot.slane %v235, 2
  %v237 = vadd.f32 %v235, %v236
  %v238 = vrot.slane %v237, 1
  %v239 = vadd.f32 %v237, %v238
  %v240 = vrot.slane %v209, 4
  %v241 = vadd.f32 %v209, %v240
  %v242 = vrot.slane %v241, 2
  %v243 = vadd.f32 %v241, %v242
  %v244 = vrot.slane %v243, 1
  %v245 = vadd.f32 %v243, %v244
  %v246 = vrot.slane %v211, 4
  %v247 = vadd.f32 %v211, %v246
  %v248 = vrot.slane %v247, 2
  %v249 = vadd.f32 %v247, %v248
  %v250 = vrot.slane %v249, 1
  %v251 = vadd.f32 %v249, %v250
  %v252 = vrot.slane %v213, 4
  %v253 = vadd.f32 %v213, %v252
  %v254 = vrot.slane %v253, 2
  %v255 = vadd.f32 %v253, %v254
  %v256 = vrot.slane %v255, 1
  %v257 = vadd.f32 %v255, %v256
  %v258 = vrot.slane %v215, 4
  %v259 = vadd.f32 %v215, %v258
  %v260 = vrot.slane %v259, 2
  %v261 = vadd.f32 %v259, %v260
  %v262 = vrot.slane %v261, 1
  %v263 = vadd.f32 %v261, %v262
  %v264 = vrcp.pop %v221
  %v265 = vmul.f32 %v221, %v264
  %v266 = vsub.f32 1.0, %v265
  %v267 = vmul.f32 %v264, %v266
  %v268 = vadd.f32 %v264, %v267
  %vm269 = vweird.f32 %v221
  %vm270 = vweird.f32 %v264
  %vm271 = vmor %vm269, %vm270
  %v272 = vsel %vm271, %v264, %v268
  %v273 = vand.u32 2147483647, %v221
  %vm274 = vcmp.eq.f32.partialorder %v273, 8.507059e+37
  %v275 = vand.u32 %v221, 2147483648
  %v276 = vor.u32 1.1754944e-38, %v275
  %v277 = vsel %vm274, %v276, %v272
  %v278 = vrcp.pop %v227
  %v279 = vmul.f32 %v227, %v278
  %v280 = vsub.f32 1.0, %v279
  %v281 = vmul.f32 %v278, %v280
  %v282 = vadd.f32 %v278, %v281
  %vm283 = vweird.f32 %v227
  %vm284 = vweird.f32 %v278
  %vm285 = vmor %vm283, %vm284
  %v286 = vsel %vm285, %v278, %v282
  %v287 = vand.u32 2147483647, %v227
  %vm288 = vcmp.eq.f32.partialorder %v287, 8.507059e+37
  %v289 = vand.u32 %v227, 2147483648
  %v290 = vor.u32 1.1754944e-38, %v289
  %v291 = vsel %vm288, %v290, %v286
  %v292 = vrcp.pop %v233
  %v293 = vmul.f32 %v233, %v292
  %v294 = vsub.f32 1.0, %v293
  %v295 = vmul.f32 %v292, %v294
  %v296 = vadd.f32 %v292, %v295
  %vm297 = vweird.f32 %v233
  %vm298 = vweird.f32 %v292
  %vm299 = vmor %vm297, %vm298
  %v300 = vsel %vm299, %v292, %v296
  %v301 = vand.u32 2147483647, %v233
  %vm302 = vcmp.eq.f32.partialorder %v301, 8.507059e+37
  %v303 = vand.u32 %v233, 2147483648
  %v304 = vor.u32 1.1754944e-38, %v303
  %v305 = vsel %vm302, %v304, %v300
  %v306 = vrcp.pop %v239
  %v307 = vmul.f32 %v239, %v306
  %v308 = vsub.f32 1.0, %v307
  %v309 = vmul.f32 %v306, %v308
  %v310 = vadd.f32 %v306, %v309
  %vm311 = vweird.f32 %v239
  %vm312 = vweird.f32 %v306
  %vm313 = vmor %vm311, %vm312
  %v314 = vsel %vm313, %v306, %v310
  %v315 = vand.u32 2147483647, %v239
  %vm316 = vcmp.eq.f32.partialorder %v315, 8.507059e+37
  %v317 = vand.u32 %v239, 2147483648
  %v318 = vor.u32 1.1754944e-38, %v317
  %v319 = vsel %vm316, %v318, %v314
  %v320 = vrcp.pop %v245
  %v321 = vmul.f32 %v245, %v320
  %v322 = vsub.f32 1.0, %v321
  %v323 = vmul.f32 %v320, %v322
  %v324 = vadd.f32 %v320, %v323
  %vm325 = vweird.f32 %v245
  %vm326 = vweird.f32 %v320
  %vm327 = vmor %vm325, %vm326
  %v328 = vsel %vm327, %v320, %v324
  %v329 = vand.u32 2147483647, %v245
  %vm330 = vcmp.eq.f32.partialorder %v329, 8.507059e+37
  %v331 = vand.u32 %v245, 2147483648
  %v332 = vor.u32 1.1754944e-38, %v331
  %v333 = vsel %vm330, %v332, %v328
  %v334 = vrcp.pop %v251
  %v335 = vmul.f32 %v251, %v334
  %v336 = vsub.f32 1.0, %v335
  %v337 = vmul.f32 %v334, %v336
  %v338 = vadd.f32 %v334, %v337
  %vm339 = vweird.f32 %v251
  %vm340 = vweird.f32 %v334
  %vm341 = vmor %vm339, %vm340
  %v342 = vsel %vm341, %v334, %v338
  %v343 = vand.u32 2147483647, %v251
  %vm344 = vcmp.eq.f32.partialorder %v343, 8.507059e+37
  %v345 = vand.u32 %v251, 2147483648
  %v346 = vor.u32 1.1754944e-38, %v345
  %v347 = vsel %vm344, %v346, %v342
  %v348 = vrcp.pop %v257
  %v349 = vmul.f32 %v257, %v348
  %v350 = vsub.f32 1.0, %v349
  %v351 = vmul.f32 %v348, %v350
  %v352 = vadd.f32 %v348, %v351
  %vm353 = vweird.f32 %v257
  %vm354 = vweird.f32 %v348
  %vm355 = vmor %vm353, %vm354
  %v356 = vsel %vm355, %v348, %v352
  %v357 = vand.u32 2147483647, %v257
  %vm358 = vcmp.eq.f32.partialorder %v357, 8.507059e+37
  %v359 = vand.u32 %v257, 2147483648
  %v360 = vor.u32 1.1754944e-38, %v359
  %v361 = vsel %vm358, %v360, %v356
  %v362 = vrcp.pop %v263
  %v363 = vmul.f32 %v263, %v362
  %v364 = vsub.f32 1.0, %v363
  %v365 = vmul.f32 %v362, %v364
  %v366 = vadd.f32 %v362, %v365
  %vm367 = vweird.f32 %v263
  %vm368 = vweird.f32 %v362
  %vm369 = vmor %vm367, %vm368
  %v370 = vsel %vm369, %v362, %v366
  %v371 = vand.u32 2147483647, %v263
  %vm372 = vcmp.eq.f32.partialorder %v371, 8.507059e+37
  %v373 = vand.u32 %v263, 2147483648
  %v374 = vor.u32 1.1754944e-38, %v373
  %v375 = vsel %vm372, %v374, %v370
  %v376 = vmul.f32 %v201, %v277
  %v377 = vmul.f32 %v203, %v291
  %v378 = vmul.f32 %v205, %v305
  %v379 = vmul.f32 %v207, %v319
  %v380 = vmul.f32 %v209, %v333
  %v381 = vmul.f32 %v211, %v347
  %v382 = vmul.f32 %v213, %v361
  %v383 = vmul.f32 %v215, %v375
  %v384 = vmul.f32 %v376, %v17
  %v385 = vmul.f32 %v377, %v18
  %v386 = vmul.f32 %v378, %v19
  %v387 = vmul.f32 %v379, %v20
  %v388 = vmul.f32 %v380, %v21
  %v389 = vmul.f32 %v381, %v22
  %v390 = vmul.f32 %v382, %v23
  %v391 = vmul.f32 %v383, %v24
  %v392 = vsel %vm34, %v384, 0.0
  %v393 = vrot.slane %v392, 4
  %v394 = vadd.f32 %v392, %v393
  %v395 = vrot.slane %v394, 2
  %v396 = vadd.f32 %v394, %v395
  %v397 = vrot.slane %v396, 1
  %v398 = vadd.f32 %v396, %v397
  %v399 = vsel %vm34, %v385, 0.0
  %v400 = vrot.slane %v399, 4
  %v401 = vadd.f32 %v399, %v400
  %v402 = vrot.slane %v401, 2
  %v403 = vadd.f32 %v401, %v402
  %v404 = vrot.slane %v403, 1
  %v405 = vadd.f32 %v403, %v404
  %v406 = vsel %vm34, %v386, 0.0
  %v407 = vrot.slane %v406, 4
  %v408 = vadd.f32 %v406, %v407
  %v409 = vrot.slane %v408, 2
  %v410 = vadd.f32 %v408, %v409
  %v411 = vrot.slane %v410, 1
  %v412 = vadd.f32 %v410, %v411
  %v413 = vsel %vm34, %v387, 0.0
  %v414 = vrot.slane %v413, 4
  %v415 = vadd.f32 %v413, %v414
  %v416 = vrot.slane %v415, 2
  %v417 = vadd.f32 %v415, %v416
  %v418 = vrot.slane %v417, 1
  %v419 = vadd.f32 %v417, %v418
  %v420 = vsel %vm34, %v388, 0.0
  %v421 = vrot.slane %v420, 4
  %v422 = vadd.f32 %v420, %v421
  %v423 = vrot.slane %v422, 2
  %v424 = vadd.f32 %v422, %v423
  %v425 = vrot.slane %v424, 1
  %v426 = vadd.f32 %v424, %v425
  %v427 = vsel %vm34, %v389, 0.0
  %v428 = vrot.slane %v427, 4
  %v429 = vadd.f32 %v427, %v428
  %v430 = vrot.slane %v429, 2
  %v431 = vadd.f32 %v429, %v430
  %v432 = vrot.slane %v431, 1
  %v433 = vadd.f32 %v431, %v432
  %v434 = vsel %vm34, %v390, 0.0
  %v435 = vrot.slane %v434, 4
  %v436 = vadd.f32 %v434, %v435
  %v437 = vrot.slane %v436, 2
  %v438 = vadd.f32 %v436, %v437
  %v439 = vrot.slane %v438, 1
  %v440 = vadd.f32 %v438, %v439
  %v441 = vsel %vm34, %v391, 0.0
  %v442 = vrot.slane %v441, 4
  %v443 = vadd.f32 %v441, %v442
  %v444 = vrot.slane %v443, 2
  %v445 = vadd.f32 %v443, %v444
  %v446 = vrot.slane %v445, 1
  %v447 = vadd.f32 %v445, %v446
  %vm456 = vcmask 1041409
  %v457 = vsel %vm456, %v405, %v398
  %vm458 = vcmask 1042434
  %v459 = vsel %vm458, %v412, %v457
  %vm460 = vcmask 1043459
  %v461 = vsel %vm460, %v419, %v459
  %vm462 = vcmask 1044484
  %v463 = vsel %vm462, %v426, %v461
  %vm464 = vcmask 1045509
  %v465 = vsel %vm464, %v433, %v463
  %vm466 = vcmask 1046534
  %v467 = vsel %vm466, %v440, %v465
  %vm468 = vcmask 1047559
  %v469 = vsel %vm468, %v447, %v467
  %471 = vst.msk [vmem:[%s4] sm:$0xff] %vm34, %v469
  // Predicated region
  $region18: #{attention_forward.1} parent=0 // pred_check
    _
  $region19: #{attention_forward.1} parent=0 // pred_check_branch
    %473 = sbr.rel (0) target = $region21
  $region20: #{attention_forward.1} parent=0 // pred_region
    _
  $region21: #{attention_forward.1} parent=0 // pred_fallthru
    _
  // Predicated region
  $region22: #{attention_forward.1} parent=0 // pred_check
    _
  $region23: #{attention_forward.1} parent=0 // pred_check_branch
    %475 = sbr.rel (0) target = $region25
  $region24: #{attention_forward.1} parent=0 // pred_region
    _
  $region25: #{attention_forward.1} parent=0 // pred_fallthru
    _

</llo_original>
